<compile_context>
chip_gen: v6e
topology: v6e:2x2x1
jax: 0.10.0
libtpu: 0.0.40
codegen_flags: <defaults>
</compile_context>

<pallas_src>
import functools

import numpy as np
import jax
import jax.numpy as jnp
from jax import lax
from jax.experimental import pallas as pl
from jax.experimental.pallas import tpu as pltpu


def _cdiv(a, b):
    return (a + b - 1) // b


def _round_up(x, m):
    return _cdiv(x, m) * m


def _pow(x, gamma):
    # gamma=2 is the module default; use exact squaring in that case (VALU only).
    if float(gamma) == 2.0:
        return x * x
    return jnp.power(x, jnp.float32(gamma))


def _loss_stats_kernel(pred_ref, gt_ref, out_ref, *, gamma, eps, n_valid,
                       needs_mask):
    """Partial reductions for one (batch, row-chunk, row-tile) grid point.

    pred_ref/gt_ref block: (1, RB, 128) in the native input dtype
    out_ref block:         (1, 1, 3, 8, 128) f32, resident across the j axis
                           rows: [sum(p*g), sum(p^2)+sum(g^2), focal_sum]
    """
    j = pl.program_id(2)

    @pl.when(j == 0)
    def _():
        out_ref[...] = jnp.zeros_like(out_ref)

    p = pred_ref[0].astype(jnp.float32)   # (RB, 128)
    g = gt_ref[0].astype(jnp.float32)     # (RB, 128)
    rb = p.shape[0]
    n8 = rb // 8

    # Dice statistics (zero-padded elements contribute exactly zero).
    inter = p * g
    union = p * p + g * g

    # Focal loss:
    #   fl = -(g*(1-pc)^γ*log(pc) + (1-g)*pc^γ*log(1-pc))
    #      = g*(b - a) - b,  a = (1-pc)^γ*log(pc),  b = pc^γ*log(1-pc)
    # (factored form shaves VALU ops; the two logs live on the EUP slot).
    pc = jnp.clip(p, eps, 1.0 - eps)
    om = 1.0 - pc
    a = _pow(om, gamma) * jnp.log(pc)
    b = _pow(pc, gamma) * jnp.log(om)
    fl = g * (b - a) - b

    if needs_mask:
        # Zero padding is NOT focal-neutral (p=0 clips to eps), so mask it out.
        base_row = (pl.program_id(1) * pl.num_programs(2) + j) * rb
        row_ids = base_row + lax.broadcasted_iota(jnp.int32, (rb, 128), 0)
        lane_ids = lax.broadcasted_iota(jnp.int32, (rb, 128), 1)
        valid = (row_ids * 128 + lane_ids) < n_valid
        fl = jnp.where(valid, fl, 0.0)

    # Sublane-aligned partial reductions: (RB,128) -> (RB//8,8,128) -> sum(0).
    # Pure vreg-wise VPU adds; no cross-sublane (XLU) work in the hot loop.
    out_ref[0, 0, 0] += inter.reshape(n8, 8, 128).sum(axis=0)
    out_ref[0, 0, 1] += union.reshape(n8, 8, 128).sum(axis=0)
    out_ref[0, 0, 2] += fl.reshape(n8, 8, 128).sum(axis=0)


def log_cosh_dice_fl_loss(pred, gt, gamma=2, eps=0.01, smooth=1.0,
                          block_rows=1024, row_chunks=None):
    assert pred.shape == gt.shape, "pred and gt must have identical shapes"
    N = pred.shape[0]
    L = int(np.prod(pred.shape[1:]))
    rows = _cdiv(L, 128)

    # When the batch is too small to fill both v7x TensorCores, split the row
    # dimension into 2 parallel chunks (harmless on single-TC v5e/v6e).
    if row_chunks is None:
        row_chunks = 2 if N < 2 else 1
    row_chunks = max(1, min(int(row_chunks), rows))

    # Sublane packing granularity for the native dtypes (8 f32, 16 bf16, ...).
    sub = 8
    for d in (pred.dtype, gt.dtype):
        sub = max(sub, 32 // max(1, jnp.dtype(d).itemsize))

    # Large row tile: RB=1024 f32 -> 0.5 MiB/input block, ~2 MiB double-buffered,
    # safely under the 16 MiB (v5e) / 32 MiB (v6e, v7x) scoped-VMEM defaults.
    RB = min(int(block_rows), _round_up(_cdiv(rows, row_chunks), sub))
    RB = _round_up(RB, sub)
    tiles_per_chunk = _cdiv(rows, row_chunks * RB)
    rows_padded = row_chunks * tiles_per_chunk * RB
    L_padded = rows_padded * 128
    needs_mask = (L_padded != L)

    def prep(x):
        # Keep the native dtype: no wrapper-side f32 materialization in HBM.
        flat = x.reshape(N, L)
        if L_padded != L:
            flat = jnp.pad(flat, ((0, 0), (0, L_padded - L)))
        return flat.reshape(N, rows_padded, 128)

    p3 = prep(pred)
    g3 = prep(gt)

    kernel = functools.partial(_loss_stats_kernel, gamma=gamma, eps=eps,
                               n_valid=L, needs_mask=needs_mask)

    in_map = lambda i, c, j: (i, c * tiles_per_chunk + j, 0)

    stats = pl.pallas_call(
        kernel,
        out_shape=jax.ShapeDtypeStruct((N, row_chunks, 3, 8, 128), jnp.float32),
        grid_spec=pltpu.PrefetchScalarGridSpec(
            num_scalar_prefetch=0,
            grid=(N, row_chunks, tiles_per_chunk),
            in_specs=[pl.BlockSpec((1, RB, 128), in_map),
                      pl.BlockSpec((1, RB, 128), in_map)],
            out_specs=pl.BlockSpec((1, 1, 3, 8, 128),
                                   lambda i, c, j: (i, c, 0, 0, 0)),
        ),
        compiler_params=pltpu.CompilerParams(
            dimension_semantics=("parallel", "parallel", "arbitrary")),
    )(p3, g3)

    # Tiny final reduction + scalar loss math in plain JAX.
    stats = stats.sum(axis=(1, 3, 4))                 # (N, 3)
    inter, union, fsum = stats[:, 0], stats[:, 1], stats[:, 2]

    # DiceLoss -> LogCosh
    dice = 1.0 - (2.0 * inter + smooth) / (union + smooth)
    x = jnp.mean(dice)
    log_cosh = jnp.log((jnp.exp(x) + jnp.exp(-x)) / 2.0)
    # FocalLoss: mean over all (un-padded) elements.
    focal = jnp.sum(fsum) / (N * L)
    return log_cosh + focal


def _reference(pred, gt, gamma=2, eps=0.01, smooth=1.0):
    pred = pred.astype(jnp.float32)
    gt = gt.astype(jnp.float32)
    axes = tuple(range(1, pred.ndim))
    inter = jnp.sum(pred * gt, axis=axes)
    union = jnp.sum(pred ** 2, axis=axes) + jnp.sum(gt ** 2, axis=axes)
    x = jnp.mean(1.0 - (2.0 * inter + smooth) / (union + smooth))
    log_cosh = jnp.log((jnp.exp(x) + jnp.exp(-x)) / 2.0)
    pc = jnp.clip(pred, eps, 1.0 - eps)
    fl = -(gt * (1.0 - pc) ** gamma * jnp.log(pc)
           + (1.0 - gt) * pc ** gamma * jnp.log(1.0 - pc))
    return log_cosh + jnp.mean(fl)


if __name__ == "__main__":
    key = jax.random.PRNGKey(0)
    k1, k2, k3, k4 = jax.random.split(key, 4)

    # Case 1: standard NCHW, per-sample size divisible by 128.
    pred1 = jax.random.uniform(k1, (2, 4, 16, 16), jnp.float32, 0.0, 1.0)
    gt1 = jax.random.bernoulli(k2, 0.5, (2, 4, 16, 16)).astype(jnp.float32)
    out1 = jax.block_until_ready(log_cosh_dice_fl_loss(pred1, gt1, gamma=2))
    ref1 = jax.block_until_ready(_reference(pred1, gt1, gamma=2))
    np.testing.assert_allclose(np.asarray(out1), np.asarray(ref1),
                               rtol=1e-5, atol=1e-5)

    # Case 2: ragged size (L % 128 != 0) and batch of 1, exercising the
    # padding mask and the 2-way row-chunk split for dual-TC chips.
    pred2 = jax.random.uniform(k3, (1, 3, 7, 9), jnp.float32, 0.0, 1.0)
    gt2 = jax.random.bernoulli(k4, 0.5, (1, 3, 7, 9)).astype(jnp.float32)
    out2 = jax.block_until_ready(log_cosh_dice_fl_loss(pred2, gt2, gamma=2))
    ref2 = jax.block_until_ready(_reference(pred2, gt2, gamma=2))
    np.testing.assert_allclose(np.asarray(out2), np.asarray(ref2),
                               rtol=1e-5, atol=1e-5)

    print("KERNEL_OK")
</pallas_src>

<mosaic_0001>
module attributes {stable_mosaic.version = 11 : i64} {
  func.func @_loss_stats_kernel(%arg0: i32, %arg1: i32, %arg2: i32, %arg3: memref<1x8x128xf32, #tpu.memory_space<vmem>>, %arg4: memref<1x8x128xf32, #tpu.memory_space<vmem>>, %arg5: memref<1x1x3x8x128xf32, #tpu.memory_space<vmem>>) attributes {dimension_semantics = [#tpu.dimension_semantics<parallel>, #tpu.dimension_semantics<parallel>, #tpu.dimension_semantics<arbitrary>], iteration_bounds = array<i64: 2, 1, 1>, scalar_prefetch = 0 : i64, scratch_operands = 0 : i64, tpu.core_type = #tpu.core_type<tc>, window_params = [{transform_indices = @transform_0, window_bounds = array<i64: 1, 8, 128>}, {transform_indices = @transform_1, window_bounds = array<i64: 1, 8, 128>}, {transform_indices = @transform_2, window_bounds = array<i64: 1, 1, 3, 8, 128>}]} {
    %c0_i32 = arith.constant 0 : i32
    %0 = arith.cmpi eq, %arg2, %c0_i32 : i32
    %1 = arith.extui %0 : i1 to i32
    %c0_i32_0 = arith.constant 0 : i32
    %2 = arith.cmpi ne, %1, %c0_i32_0 : i32
    scf.if %2 {
      %cst_39 = arith.constant 0.000000e+00 : f32
      %50 = vector.broadcast %cst_39 : f32 to vector<1x1x3x8x128xf32>
      %c0_40 = arith.constant 0 : index
      %c0_41 = arith.constant 0 : index
      %c0_42 = arith.constant 0 : index
      %c0_43 = arith.constant 0 : index
      %c0_44 = arith.constant 0 : index
      %51 = vector.load %arg5[%c0_40, %c0_41, %c0_42, %c0_43, %c0_44] : memref<1x1x3x8x128xf32, #tpu.memory_space<vmem>>, vector<1x1x3x8x128xf32>
      tpu.vector_store %arg5[%c0_40, %c0_41, %c0_42, %c0_43, %c0_44], %50 {strides = array<i32>} : memref<1x1x3x8x128xf32, #tpu.memory_space<vmem>>, vector<1x1x3x8x128xf32>,
    } else {
    }
    %c0 = arith.constant 0 : index
    %c0_1 = arith.constant 0 : index
    %c0_2 = arith.constant 0 : index
    %3 = vector.load %arg3[%c0, %c0_1, %c0_2] : memref<1x8x128xf32, #tpu.memory_space<vmem>>, vector<1x8x128xf32>
    %4 = vector.shape_cast %3 : vector<1x8x128xf32> to vector<8x128xf32>
    %c0_3 = arith.constant 0 : index
    %c0_4 = arith.constant 0 : index
    %c0_5 = arith.constant 0 : index
    %5 = vector.load %arg4[%c0_3, %c0_4, %c0_5] : memref<1x8x128xf32, #tpu.memory_space<vmem>>, vector<1x8x128xf32>
    %6 = vector.shape_cast %5 : vector<1x8x128xf32> to vector<8x128xf32>
    %7 = arith.mulf %4, %6 : vector<8x128xf32>
    %8 = arith.mulf %4, %4 : vector<8x128xf32>
    %9 = arith.mulf %6, %6 : vector<8x128xf32>
    %10 = arith.addf %8, %9 : vector<8x128xf32>
    %cst = arith.constant 0.00999999977 : f32
    %cst_6 = arith.constant 9.900000e-01 : f32
    %11 = vector.broadcast %cst : f32 to vector<8x128xf32>
    %12 = arith.maximumf %11, %4 : vector<8x128xf32>
    %13 = vector.broadcast %cst_6 : f32 to vector<8x128xf32>
    %14 = arith.minimumf %13, %12 : vector<8x128xf32>
    %cst_7 = arith.constant 1.000000e+00 : f32
    %15 = vector.broadcast %cst_7 : f32 to vector<8x128xf32>
    %16 = arith.subf %15, %14 : vector<8x128xf32>
    %17 = arith.mulf %16, %16 : vector<8x128xf32>
    %18 = math.log %14 : vector<8x128xf32>
    %19 = arith.mulf %17, %18 : vector<8x128xf32>
    %20 = arith.mulf %14, %14 : vector<8x128xf32>
    %21 = math.log %16 : vector<8x128xf32>
    %22 = arith.mulf %20, %21 : vector<8x128xf32>
    %23 = arith.subf %22, %19 : vector<8x128xf32>
    %24 = arith.mulf %6, %23 : vector<8x128xf32>
    %25 = arith.subf %24, %22 : vector<8x128xf32>
    %c0_8 = arith.constant 0 : index
    %c0_9 = arith.constant 0 : index
    %c0_10 = arith.constant 0 : index
    %c0_11 = arith.constant 0 : index
    %c0_12 = arith.constant 0 : index
    %26 = vector.load %arg5[%c0_8, %c0_9, %c0_10, %c0_11, %c0_12] : memref<1x1x3x8x128xf32, #tpu.memory_space<vmem>>, vector<1x1x1x8x128xf32>
    %27 = vector.shape_cast %26 : vector<1x1x1x8x128xf32> to vector<8x128xf32>
    %28 = vector.shape_cast %7 : vector<8x128xf32> to vector<1x8x128xf32>
    %cst_13 = arith.constant dense<0.000000e+00> : vector<8x128xf32>
    %29 = vector.multi_reduction <add>, %28, %cst_13 [0] : vector<1x8x128xf32> to vector<8x128xf32>
    %30 = arith.addf %27, %29 : vector<8x128xf32>
    %c0_14 = arith.constant 0 : index
    %c0_15 = arith.constant 0 : index
    %c0_16 = arith.constant 0 : index
    %c0_17 = arith.constant 0 : index
    %c0_18 = arith.constant 0 : index
    %31 = vector.load %arg5[%c0_14, %c0_15, %c0_16, %c0_17, %c0_18] : memref<1x1x3x8x128xf32, #tpu.memory_space<vmem>>, vector<1x1x1x8x128xf32>
    %32 = vector.shape_cast %31 : vector<1x1x1x8x128xf32> to vector<8x128xf32>
    %33 = vector.shape_cast %30 : vector<8x128xf32> to vector<1x1x1x8x128xf32>
    tpu.vector_store %arg5[%c0_14, %c0_15, %c0_16, %c0_17, %c0_18], %33 {strides = array<i32>} : memref<1x1x3x8x128xf32, #tpu.memory_space<vmem>>, vector<1x1x1x8x128xf32>,
    %c0_19 = arith.constant 0 : index
    %c0_20 = arith.constant 0 : index
    %c1 = arith.constant 1 : index
    %c0_21 = arith.constant 0 : index
    %c0_22 = arith.constant 0 : index
    %34 = vector.load %arg5[%c0_19, %c0_20, %c1, %c0_21, %c0_22] : memref<1x1x3x8x128xf32, #tpu.memory_space<vmem>>, vector<1x1x1x8x128xf32>
    %35 = vector.shape_cast %34 : vector<1x1x1x8x128xf32> to vector<8x128xf32>
    %36 = vector.shape_cast %10 : vector<8x128xf32> to vector<1x8x128xf32>
    %cst_23 = arith.constant dense<0.000000e+00> : vector<8x128xf32>
    %37 = vector.multi_reduction <add>, %36, %cst_23 [0] : vector<1x8x128xf32> to vector<8x128xf32>
    %38 = arith.addf %35, %37 : vector<8x128xf32>
    %c0_24 = arith.constant 0 : index
    %c0_25 = arith.constant 0 : index
    %c1_26 = arith.constant 1 : index
    %c0_27 = arith.constant 0 : index
    %c0_28 = arith.constant 0 : index
    %39 = vector.load %arg5[%c0_24, %c0_25, %c1_26, %c0_27, %c0_28] : memref<1x1x3x8x128xf32, #tpu.memory_space<vmem>>, vector<1x1x1x8x128xf32>
    %40 = vector.shape_cast %39 : vector<1x1x1x8x128xf32> to vector<8x128xf32>
    %41 = vector.shape_cast %38 : vector<8x128xf32> to vector<1x1x1x8x128xf32>
    tpu.vector_store %arg5[%c0_24, %c0_25, %c1_26, %c0_27, %c0_28], %41 {strides = array<i32>} : memref<1x1x3x8x128xf32, #tpu.memory_space<vmem>>, vector<1x1x1x8x128xf32>,
    %c0_29 = arith.constant 0 : index
    %c0_30 = arith.constant 0 : index
    %c2 = arith.constant 2 : index
    %c0_31 = arith.constant 0 : index
    %c0_32 = arith.constant 0 : index
    %42 = vector.load %arg5[%c0_29, %c0_30, %c2, %c0_31, %c0_32] : memref<1x1x3x8x128xf32, #tpu.memory_space<vmem>>, vector<1x1x1x8x128xf32>
    %43 = vector.shape_cast %42 : vector<1x1x1x8x128xf32> to vector<8x128xf32>
    %44 = vector.shape_cast %25 : vector<8x128xf32> to vector<1x8x128xf32>
    %cst_33 = arith.constant dense<0.000000e+00> : vector<8x128xf32>
    %45 = vector.multi_reduction <add>, %44, %cst_33 [0] : vector<1x8x128xf32> to vector<8x128xf32>
    %46 = arith.addf %43, %45 : vector<8x128xf32>
    %c0_34 = arith.constant 0 : index
    %c0_35 = arith.constant 0 : index
    %c2_36 = arith.constant 2 : index
    %c0_37 = arith.constant 0 : index
    %c0_38 = arith.constant 0 : index
    %47 = vector.load %arg5[%c0_34, %c0_35, %c2_36, %c0_37, %c0_38] : memref<1x1x3x8x128xf32, #tpu.memory_space<vmem>>, vector<1x1x1x8x128xf32>
    %48 = vector.shape_cast %47 : vector<1x1x1x8x128xf32> to vector<8x128xf32>
    %49 = vector.shape_cast %46 : vector<8x128xf32> to vector<1x1x1x8x128xf32>
    tpu.vector_store %arg5[%c0_34, %c0_35, %c2_36, %c0_37, %c0_38], %49 {strides = array<i32>} : memref<1x1x3x8x128xf32, #tpu.memory_space<vmem>>, vector<1x1x1x8x128xf32>,
    return
  }
  func.func @transform_0(%arg0: i32, %arg1: i32, %arg2: i32) -> (i32, i32, i32) {
    %c1_i32 = arith.constant 1 : i32
    %0 = arith.muli %arg1, %c1_i32 : i32
    %1 = arith.addi %0, %arg2 : i32
    %c0_i32 = arith.constant 0 : i32
    %c0_i32_0 = arith.constant 0 : i32
    return %arg0, %1, %c0_i32 : i32, i32, i32
  }
  func.func @transform_1(%arg0: i32, %arg1: i32, %arg2: i32) -> (i32, i32, i32) {
    %c1_i32 = arith.constant 1 : i32
    %0 = arith.muli %arg1, %c1_i32 : i32
    %1 = arith.addi %0, %arg2 : i32
    %c0_i32 = arith.constant 0 : i32
    %c0_i32_0 = arith.constant 0 : i32
    return %arg0, %1, %c0_i32 : i32, i32, i32
  }
  func.func @transform_2(%arg0: i32, %arg1: i32, %arg2: i32) -> (i32, i32, i32, i32, i32) {
    %c0_i32 = arith.constant 0 : i32
    %c0_i32_0 = arith.constant 0 : i32
    %c0_i32_1 = arith.constant 0 : i32
    %c0_i32_2 = arith.constant 0 : i32
    return %arg0, %arg1, %c0_i32, %c0_i32_0, %c0_i32_1 : i32, i32, i32, i32, i32
  }
}

</mosaic_0001>

<llo_original>
// kernel: tpu_custom_call.1
$region0: #{tpu_custom_call.1}
  #allocation0 [shape = 'u32[]', space=smem, size = 0x4, offset = 0x4, fixed_abs, tag = 'smem constant byte address 0x4 - core index']
  #allocation1 [shape = 'u32[144,128]{1,0:T(1,128)}', space=vmem, size = 0x12000, scoped, tag = 'internal scratch']
  %s0 = inlined_call_operand.hbm [shape: f32[2,8,128], index: 0, kind: input, shape index: {}]
  %s1 = inlined_call_operand.hbm [shape: f32[2,8,128], index: 1, kind: input, shape index: {}]
  %s2 = inlined_call_operand.hbm [shape: f32[2,1,3,8,128], index: 2, kind: output, shape index: {}]
  %s3 = sld [smem:[#allocation0]]
  $region53: #{tpu_custom_call.1} parent=0
    _
  %s5 = ssub.s32 1, %s3
  %s6 = scalar_select 0, %s5, %s3
  $region1: #{tpu_custom_call.1} parent=0
    #allocation2 [shape = 'u8[8192]{0}', space=vmem, size = 0x2000, scoped, tag = 'input window, operand 0']
    #allocation3 [shape = 's32[2]{0}', space=sflag, size = 0x8, scoped, tag = 'scoped memory for tpu_custom_call.1']
    #allocation4 [shape = 's32[2]{0}', space=sflag, size = 0x8, scoped, tag = 'scoped memory for tpu_custom_call.1']
    #allocation5 [shape = 'u8[8192]{0}', space=vmem, size = 0x2000, scoped, tag = 'input window, operand 1']
    #allocation6 [shape = 's32[2]{0}', space=sflag, size = 0x8, scoped, tag = 'scoped memory for tpu_custom_call.1']
    #allocation7 [shape = 'u8[24576]{0}', space=vmem, size = 0x6000, scoped, tag = 'output window, operand 0']
    %7 = vsyncpa [#allocation3], 0
    %s8 = scalar_lea.sflag [#allocation3], 1
    %9 = vsyncpa %s8, 0
    %10 = vsyncpa [#allocation6], 0
    %s11 = scalar_lea.sflag [#allocation6], 1
    %12 = vsyncpa %s11, 0
    %13 = vsyncpa [#allocation4], 0
    %s14 = scalar_lea.sflag [#allocation4], 1
    %15 = vsyncpa %s14, 0
    loop: start=0, step=1, limit=4
    $region2: #{tpu_custom_call.1} parent=1 // loop_pre_header
      _
    $region3: #{tpu_custom_call.1} parent=1 // loop_header
      %s17 = sphi 0, %s21
      %p18 = scmp.ge.s32.totalorder %s17, 4
      %s24 = sphi 0, %s43
      %s25 = sphi 0, %s39
      %s26 = sphi 0, %s35
      %s27 = sphi 0, %s24
      %s28 = sphi 0, %s25
      %s29 = sphi 0, %s26
      %s30 = sphi 0, %s27
      %s31 = sphi 0, %s28
      %s32 = sphi 0, %s29
      %s50 = sphi 0, %s52
      %s53 = sphi 0, %s50
      %s54 = sphi 0, %s53
      %s70 = sphi 0, %s54
      %s80 = sphi 0, %s82
      %s83 = sphi 0, %s80
      %s84 = sphi 0, %s83
      %s100 = sphi 0, %s84
      %s108 = sphi 0, %s110
      %s111 = sphi 0, %s108
      %s112 = sphi 0, %s111
      %s128 = sphi 0, %s112
    $region4: #{tpu_custom_call.1} parent=1 // loop_header_branch
      %20 = sbr.rel (%p18) target = $region8
    $region5: #{tpu_custom_call.1} parent=1 // loop_body
      %s22 = ssub.s32 %s17, 1
      %s23 = ssub.s32 %s17, 2
      %s33 = sadd.s32 1, %s26
      %p34 = scmp.ge.s32.totalorder %s33, 1
      %s35 = scalar_select %p34, 0, %s33
      %s36 = sadd.s32 1, %s25
      %s37 = scalar_select %p34, %s36, %s25
      %p38 = scmp.ge.s32.totalorder %s37, 1
      %s39 = scalar_select %p38, 0, %s37
      %s40 = sadd.s32 1, %s24
      %s41 = scalar_select %p38, %s40, %s24
      %p42 = scmp.ge.s32.totalorder %s41, 2
      %s43 = scalar_select %p42, 0, %s41
      %s44 = sadd.s32 %s25, %s26
      %s45 = sadd.s32 %s39, %s35
      %s46 = ssub.s32 %s24, %s43
      %s47 = ssub.s32 %s44, %s45
      %s48 = sor.u32 %s46, %s47
      %p49 = scmp.eq.s32.totalorder %s48, 0
      %s51 = sadd.s32 %s50, 1
      %s52 = scalar_select %p49, %s50, %s51
      %p55 = pneg %p49
      %p56 = scmp.eq.s32.totalorder %s17, 1
      %p57 = por %p55, %p56
      %p58 = scmp.ne.s32.totalorder %s50, %s53
      %p59 = scmp.eq.s32.totalorder %s17, 0
      %p60 = por %p58, %p59
      %p61 = scmp.ne.s32.totalorder %s50, %s53
      %p62 = scmp.eq.s32.totalorder %s22, 1
      %p63 = por %p61, %p62
      %p64 = scmp.ne.s32.totalorder %s53, %s54
      %p65 = scmp.eq.s32.totalorder %s22, 0
      %p66 = por %p64, %p65
      %p67 = scmp.ne.s32.totalorder %s53, %s54
      %p68 = scmp.eq.s32.totalorder %s23, 1
      %p69 = por %p67, %p68
      %p71 = scmp.ne.s32.totalorder %s54, %s70
      %p72 = scmp.eq.s32.totalorder %s23, 0
      %p73 = por %p71, %p72
      %s74 = sadd.s32 %s25, %s26
      %s75 = sadd.s32 %s39, %s35
      %s76 = ssub.s32 %s24, %s43
      %s77 = ssub.s32 %s74, %s75
      %s78 = sor.u32 %s76, %s77
      %p79 = scmp.eq.s32.totalorder %s78, 0
      %s81 = sadd.s32 %s80, 1
      %s82 = scalar_select %p79, %s80, %s81
      %p85 = pneg %p79
      %p86 = scmp.eq.s32.totalorder %s17, 1
      %p87 = por %p85, %p86
      %p88 = scmp.ne.s32.totalorder %s80, %s83
      %p89 = scmp.eq.s32.totalorder %s17, 0
      %p90 = por %p88, %p89
      %p91 = scmp.ne.s32.totalorder %s80, %s83
      %p92 = scmp.eq.s32.totalorder %s22, 1
      %p93 = por %p91, %p92
      %p94 = scmp.ne.s32.totalorder %s83, %s84
      %p95 = scmp.eq.s32.totalorder %s22, 0
      %p96 = por %p94, %p95
      %p97 = scmp.ne.s32.totalorder %s83, %s84
      %p98 = scmp.eq.s32.totalorder %s23, 1
      %p99 = por %p97, %p98
      %p101 = scmp.ne.s32.totalorder %s84, %s100
      %p102 = scmp.eq.s32.totalorder %s23, 0
      %p103 = por %p101, %p102
      %s104 = ssub.s32 %s24, %s43
      %s105 = ssub.s32 %s25, %s39
      %s106 = sor.u32 %s104, %s105
      %p107 = scmp.eq.s32.totalorder %s106, 0
      %s109 = sadd.s32 %s108, 1
      %s110 = scalar_select %p107, %s108, %s109
      %p113 = pneg %p107
      %p114 = scmp.eq.s32.totalorder %s17, 1
      %p115 = por %p113, %p114
      %p116 = scmp.ne.s32.totalorder %s108, %s111
      %p117 = scmp.eq.s32.totalorder %s17, 0
      %p118 = por %p116, %p117
      %p119 = scmp.ne.s32.totalorder %s108, %s111
      %p120 = scmp.eq.s32.totalorder %s22, 1
      %p121 = por %p119, %p120
      %p122 = scmp.ne.s32.totalorder %s111, %s112
      %p123 = scmp.eq.s32.totalorder %s22, 0
      %p124 = por %p122, %p123
      %p125 = scmp.ne.s32.totalorder %s111, %s112
      %p126 = scmp.eq.s32.totalorder %s23, 1
      %p127 = por %p125, %p126
      %p129 = scmp.ne.s32.totalorder %s112, %s128
      %p130 = scmp.eq.s32.totalorder %s23, 0
      %p131 = por %p129, %p130
      %p132 = scmp.le.s32.totalorder 1, %s17
      %p133 = scmp.lt.s32.totalorder %s17, 3
      %p134 = pnand %p132, %p133
      %p135 = pneg %p134
      // Predicated region
      $region9: #{tpu_custom_call.1} parent=5 // pred_check
        _
      $region10: #{tpu_custom_call.1} parent=5 // pred_check_branch
        %137 = sbr.rel (%p134) target = $region12
      $region11: #{tpu_custom_call.1} parent=5 // pred_region
        %s138 = ssub.s32 %s17, 1
      $region12: #{tpu_custom_call.1} parent=5 // pred_fallthru
        _
      %p139 = scmp.lt.s32.totalorder %s17, 2
      // Predicated region
      $region13: #{tpu_custom_call.1} parent=5 // pred_check
        %p140 = pneg %p139
      $region14: #{tpu_custom_call.1} parent=5 // pred_check_branch
        %142 = sbr.rel (%p140) target = $region16
      $region15: #{tpu_custom_call.1} parent=5 // pred_region
        // Predicated region
        $region17: #{tpu_custom_call.1} parent=15 // pred_check
          %p143 = pneg %p60
        $region18: #{tpu_custom_call.1} parent=15 // pred_check_branch
          %145 = sbr.rel (%p143) target = $region20
        $region19: #{tpu_custom_call.1} parent=15 // pred_region
          %s146 = sand.u32 %s50, 1
          %s147 = scalar_lea.sflag [#allocation3], %s146
          %s148 = sand.u32 %s50, 1
          %s149 = smul.addr %s148, 8
          %s150 = scalar_lea.vmem [#allocation2], %s149
          %s151 = sadd.s32 %s25, %s26
          %s153 = ssub.s32 128, 128
          %154 = vsyncadd %s147, %s153
          %s155 = sadd.s32 %s151, %s24
          %s156 = smul.addr %s155, 128
          %s157 = scalar_lea.hbm %s0, %s156
          %s159 = sshll.u32 %s150, 4
          %s160 = int_to_ptr.vmem [resolvable:$true] %s159
          %162 = dma.hbm_to_vmem [thread:$0]  %s157, 128, %s160, %s147
        $region20: #{tpu_custom_call.1} parent=15 // pred_fallthru
          _
        // Predicated region
        $region21: #{tpu_custom_call.1} parent=15 // pred_check
          %p163 = pneg %p90
        $region22: #{tpu_custom_call.1} parent=15 // pred_check_branch
          %165 = sbr.rel (%p163) target = $region24
        $region23: #{tpu_custom_call.1} parent=15 // pred_region
          %s166 = sand.u32 %s80, 1
          %s167 = scalar_lea.sflag [#allocation6], %s166
          %s168 = sand.u32 %s80, 1
          %s169 = smul.addr %s168, 8
          %s170 = scalar_lea.vmem [#allocation5], %s169
          %s171 = sadd.s32 %s25, %s26
          %s173 = ssub.s32 128, 128
          %174 = vsyncadd %s167, %s173
          %s175 = sadd.s32 %s171, %s24
          %s176 = smul.addr %s175, 128
          %s177 = scalar_lea.hbm %s1, %s176
          %s179 = sshll.u32 %s170, 4
          %s180 = int_to_ptr.vmem [resolvable:$true] %s179
          %182 = dma.hbm_to_vmem [thread:$0]  %s177, 128, %s180, %s167
        $region24: #{tpu_custom_call.1} parent=15 // pred_fallthru
          _
      $region16: #{tpu_custom_call.1} parent=5 // pred_fallthru
        _
      %p183 = scmp.le.s32.totalorder 1, %s17
      %p184 = scmp.lt.s32.totalorder %s17, 3
      %p185 = pnand %p183, %p184
      %p186 = pneg %p185
      // Predicated region
      $region25: #{tpu_custom_call.1} parent=5 // pred_check
        _
      $region26: #{tpu_custom_call.1} parent=5 // pred_check_branch
        %188 = sbr.rel (%p185) target = $region28
      $region27: #{tpu_custom_call.1} parent=5 // pred_region
        %s189 = ssub.s32 %s17, 1
        %s190 = sand.u32 %s53, 1
        %s191 = scalar_lea.sflag [#allocation3], %s190
        %s192 = sand.u32 %s53, 1
        %s193 = smul.addr %s192, 8
        %s194 = scalar_lea.vmem [#allocation2], %s193
        // Predicated region
        $region29: #{tpu_custom_call.1} parent=27 // pred_check
          %p195 = pneg %p66
        $region30: #{tpu_custom_call.1} parent=27 // pred_check_branch
          %197 = sbr.rel (%p195) target = $region32
        $region31: #{tpu_custom_call.1} parent=27 // pred_region
          %198 = dma.done %s191, 128
        $region32: #{tpu_custom_call.1} parent=27 // pred_fallthru
          _
        %s199 = sand.u32 %s83, 1
        %s200 = scalar_lea.sflag [#allocation6], %s199
        %s201 = sand.u32 %s83, 1
        %s202 = smul.addr %s201, 8
        %s203 = scalar_lea.vmem [#allocation5], %s202
        // Predicated region
        $region33: #{tpu_custom_call.1} parent=27 // pred_check
          %p204 = pneg %p96
        $region34: #{tpu_custom_call.1} parent=27 // pred_check_branch
          %206 = sbr.rel (%p204) target = $region36
        $region35: #{tpu_custom_call.1} parent=27 // pred_region
          %207 = dma.done %s200, 128
        $region36: #{tpu_custom_call.1} parent=27 // pred_fallthru
          _
        %s208 = sand.u32 %s53, 1
        %s209 = scalar_lea.sflag [#allocation3], %s208
        %s210 = sand.u32 %s53, 1
        %s211 = smul.addr %s210, 8
        %s212 = scalar_lea.vmem [#allocation2], %s211
        %p213 = pneg %p66
        %p214 = pneg %p63
        %s215 = sand.u32 %s83, 1
        %s216 = scalar_lea.sflag [#allocation6], %s215
        %s217 = sand.u32 %s83, 1
        %s218 = smul.addr %s217, 8
        %s219 = scalar_lea.vmem [#allocation5], %s218
        %p220 = pneg %p96
        %p221 = pneg %p93
        %p222 = pneg %p124
        %p223 = pneg %p121
        %s224 = sand.u32 %s111, 1
        %s225 = scalar_lea.sflag [#allocation4], %s224
        %s226 = sand.u32 %s111, 1
        %s227 = smul.addr %s226, 24
        %s228 = scalar_lea.vmem [#allocation7], %s227
        %s229 = sadd.s32 %s28, %s29
        %s230 = sadd.s32 %s28, %s29
        %p231 = scmp.eq.s32.totalorder %s29, 0
        // Predicated region
        $region37: #{tpu_custom_call.1} parent=27 // pred_check
          %p232 = pneg %p231
        $region38: #{tpu_custom_call.1} parent=27 // pred_check_branch
          %234 = sbr.rel (%p232) target = $region40
        $region39: #{tpu_custom_call.1} parent=27 // pred_region
          %235 = vst [vmem:[%s228] sm:$0xff] 0.0
          %236 = vst [vmem:[%s228 + $0x8] sm:$0xff] 0.0
          %237 = vst [vmem:[%s228 + $0x10] sm:$0xff] 0.0
        $region40: #{tpu_custom_call.1} parent=27 // pred_fallthru
          _
        %v238 = vld [vmem:[%s194] sm:$0xff]
        %v239 = vld [vmem:[%s203] sm:$0xff]
        %v240 = vmul.f32 %v238, %v239
        %v241 = vmul.f32 %v238, %v238
        %v242 = vmul.f32 %v239, %v239
        %v243 = vadd.f32 %v241, %v242
        %v244 = vmax.f32 %v238, 0.01
        %v245 = vmin.f32 %v244, 0.99
        %v246 = vsub.f32 1.0, %v245
        %v247 = vmul.f32 %v246, %v246
        %v248 = vlog2.pop %v245
        %v249 = vmul.f32 %v248, 0.6931472
        %v250 = vmul.f32 %v247, %v249
        %v251 = vmul.f32 %v245, %v245
        %v252 = vlog2.pop %v246
        %v253 = vmul.f32 %v252, 0.6931472
        %v254 = vmul.f32 %v251, %v253
        %v255 = vsub.f32 %v254, %v250
        %v256 = vmul.f32 %v239, %v255
        %v257 = vsub.f32 %v256, %v254
        %v258 = vld [vmem:[%s228] sm:$0xff]
        %v259 = vadd.f32 %v240, 0.0
        %v260 = vadd.f32 %v258, %v259
        %261 = vst [vmem:[%s228] sm:$0xff] %v260
        %s262 = scalar_lea.vmem %s228, 8 [#allocation7]
        %v263 = vld [vmem:[%s262] sm:$0xff]
        %v264 = vadd.f32 %v243, 0.0
        %v265 = vadd.f32 %v263, %v264
        %266 = vst [vmem:[%s262] sm:$0xff] %v265
        %s267 = scalar_lea.vmem %s228, 16 [#allocation7]
        %v268 = vld [vmem:[%s267] sm:$0xff]
        %v269 = vadd.f32 %v257, 0.0
        %v270 = vadd.f32 %v268, %v269
        %271 = vst [vmem:[%s267] sm:$0xff] %v270
        %s272 = sand.u32 %s111, 1
        %s273 = scalar_lea.sflag [#allocation4], %s272
        %s274 = sand.u32 %s111, 1
        %s275 = smul.addr %s274, 24
        %s276 = scalar_lea.vmem [#allocation7], %s275
        // Predicated region
        $region41: #{tpu_custom_call.1} parent=27 // pred_check
          %p277 = pneg %p121
        $region42: #{tpu_custom_call.1} parent=27 // pred_check_branch
          %279 = sbr.rel (%p277) target = $region44
        $region43: #{tpu_custom_call.1} parent=27 // pred_region
          %s281 = ssub.s32 384, 384
          %282 = vsyncadd %s273, %s281
          %s283 = smul.addr %s28, 3
          %s284 = smul.addr %s27, 3
          %s285 = sadd.s32 %s283, %s284
          %s286 = smul.addr %s285, 128
          %s287 = scalar_lea.hbm %s2, %s286
          %s288 = sshll.u32 %s276, 4
          %s289 = int_to_ptr.vmem [resolvable:$true] %s288
          %294 = dma.vmem_to_hbm [thread:$0]  %s289, 384, %s287, %s273, 128, 128, 8
        $region44: #{tpu_custom_call.1} parent=27 // pred_fallthru
          _
      $region28: #{tpu_custom_call.1} parent=5 // pred_fallthru
        _
      %p295 = scmp.le.s32.totalorder 2, %s17
      // Predicated region
      $region45: #{tpu_custom_call.1} parent=5 // pred_check
        %p296 = pneg %p295
      $region46: #{tpu_custom_call.1} parent=5 // pred_check_branch
        %298 = sbr.rel (%p296) target = $region48
      $region47: #{tpu_custom_call.1} parent=5 // pred_region
        %s299 = ssub.s32 %s17, 2
        // Predicated region
        $region49: #{tpu_custom_call.1} parent=47 // pred_check
          %p300 = pneg %p127
        $region50: #{tpu_custom_call.1} parent=47 // pred_check_branch
          %302 = sbr.rel (%p300) target = $region52
        $region51: #{tpu_custom_call.1} parent=47 // pred_region
          %s303 = sand.u32 %s112, 1
          %s304 = scalar_lea.sflag [#allocation4], %s303
          %s305 = sand.u32 %s112, 1
          %s306 = smul.addr %s305, 24
          %s307 = scalar_lea.vmem [#allocation7], %s306
          %308 = dma.done %s304, 384
        $region52: #{tpu_custom_call.1} parent=47 // pred_fallthru
          _
      $region48: #{tpu_custom_call.1} parent=5 // pred_fallthru
        _
    $region6: #{tpu_custom_call.1} parent=1 // loop_footer
      %s21 = sadd.s32 1, %s17
    $region7: #{tpu_custom_call.1} parent=1 // loop_footer_branch
      %16 = sbr.rel target = $region3
    $region8: #{tpu_custom_call.1} parent=1 // loop_exit
      _
    %309 = vsyncpa [#allocation3], 1
    %s310 = scalar_lea.sflag [#allocation3], 1
    %311 = vsyncpa %s310, 1
    %312 = vsyncpa [#allocation6], 1
    %s313 = scalar_lea.sflag [#allocation6], 1
    %314 = vsyncpa %s313, 1
    %315 = vsyncpa [#allocation4], 1
    %s316 = scalar_lea.sflag [#allocation4], 1
    %317 = vsyncpa %s316, 1

</llo_original>
